<compile_context>
chip_gen: v7x
topology: tpu7x:2x2x1
jax: 0.10.0
libtpu: 0.0.40
codegen_flags: <defaults>
</compile_context>

<pallas_src>
import math

import numpy as np
import jax
import jax.numpy as jnp
from jax.experimental import pallas as pl
from jax.experimental.pallas import tpu as pltpu

# ----------------------------------------------------------------------------
# Static module configuration (mirrors __init__).
# ----------------------------------------------------------------------------
LIMS = [[-50.0, 50.0], [-50.0, 50.0], [-4.0, 2.0]]   # x, y, z limits
GRID_METERS = [0.5, 0.5, 0.2]
SCALES = [0.5, 1]

GRID_SIZES = [
    int(round((LIMS[d][1] - LIMS[d][0]) / GRID_METERS[d])) for d in range(3)
]  # [200, 200, 30]

LANES = 128          # lane width
TN_TARGET = 32768    # points per grid step (256 sublane-rows x 128 lanes)


def _fold_constants(scale, d):
    """idx = x*mul + add  ==  (x - lim_min)/(lim_max - lim_min) * (size // scale)."""
    size = float(math.floor(float(GRID_SIZES[d]) / float(scale)))
    rng = np.float32(LIMS[d][1] - LIMS[d][0])
    mul = np.float32(size) / rng
    add = np.float32(-LIMS[d][0]) * mul
    return float(mul), float(add)   # python floats -> traced as literals, not consts


def _make_quant_kernel(num_scales):
    """Builds the Pallas kernel with per-(scale, axis) scalar constants baked in."""
    consts = [[_fold_constants(s, d) for d in range(3)] for s in SCALES]

    def quant_kernel(xyz_ref, idx_ref, res_ref):
        # xyz_ref : (3, R, 128) f32   -- points on sublanes AND lanes (full vregs)
        # idx_ref : (S, 3, R, 128) i32 out
        # res_ref : (S, 3, R, 128) f32 out
        for d in range(3):
            x = xyz_ref[d]                               # (R, 128)
            for s in range(num_scales):
                mul, add = consts[s][d]
                idx = x * mul + add                      # fused constant fold, no divide
                idx_i = idx.astype(jnp.int32)            # f32->s32 truncates toward zero
                idx_ref[s, d] = idx_i
                res_ref[s, d] = idx - idx_i.astype(jnp.float32)

    return quant_kernel


def pc_preprocessor_3d_slim(pc, indicator):
    """JAX/Pallas equivalent of PcPreprocessor3DSlim.forward.

    pc:        (N, C) float32 array, C >= 3, coords within LIMS.
    indicator: python list of cumulative counts, length batch + 1.
    Returns (pc, info) mirroring the PyTorch module (indices as int32).
    """
    N = pc.shape[0]
    num_scales = len(SCALES)
    batch = len(indicator) - 1

    # --- glue: per-point batch id from the python indicator list (host side) ---
    counts = np.diff(np.asarray(indicator, dtype=np.int64))
    indicator_t = np.repeat(np.arange(batch, dtype=np.int32), counts)
    assert indicator_t.shape[0] == N
    bidx_col = jnp.asarray(indicator_t)[:, None]               # (N, 1) int32

    # --- tile-size selection: big blocks for HBM efficiency, shrink for tiny N ---
    n128 = ((N + LANES - 1) // LANES) * LANES
    tn = TN_TARGET if n128 >= TN_TARGET else n128              # multiple of 128
    n_pad = ((N + tn - 1) // tn) * tn
    rows = tn // LANES                                          # sublane rows per block
    grid = (n_pad // tn,)

    # --- glue: coords -> (3, n_pad/128, 128) lane/sublane-dense slab ---
    xyz = jnp.transpose(pc[:, :3]).astype(jnp.float32)          # (3, N)
    if n_pad != N:
        # pad with the mid-point of the limits: in-range garbage, sliced off below
        pad_vals = jnp.asarray(
            [[(LIMS[d][0] + LIMS[d][1]) * 0.5] for d in range(3)], dtype=jnp.float32)
        xyz = jnp.concatenate(
            [xyz, jnp.broadcast_to(pad_vals, (3, n_pad - N))], axis=1)
    xyz = xyz.reshape(3, n_pad // LANES, LANES)

    kernel = _make_quant_kernel(num_scales)
    idx_all, res_all = pl.pallas_call(
        kernel,
        out_shape=(
            jax.ShapeDtypeStruct((num_scales, 3, n_pad // LANES, LANES), jnp.int32),
            jax.ShapeDtypeStruct((num_scales, 3, n_pad // LANES, LANES), jnp.float32),
        ),
        grid_spec=pltpu.PrefetchScalarGridSpec(
            num_scalar_prefetch=0,
            grid=grid,
            in_specs=[pl.BlockSpec((3, rows, LANES), lambda i: (0, i, 0))],
            out_specs=(
                pl.BlockSpec((num_scales, 3, rows, LANES), lambda i: (0, 0, i, 0)),
                pl.BlockSpec((num_scales, 3, rows, LANES), lambda i: (0, 0, i, 0)),
            ),
        ),
        compiler_params=pltpu.CompilerParams(
            dimension_semantics=("parallel",)
        ),
    )(xyz)

    # --- glue: back to the PyTorch layout (consumer expects (N,4)/(N,3)) ---
    idx_all = idx_all.reshape(num_scales, 3, n_pad)[:, :, :N]
    res_all = res_all.reshape(num_scales, 3, n_pad)[:, :, :N]

    info = {"batch": batch}
    for s, scale in enumerate(SCALES):
        info[scale] = {
            "bxyz_indx": jnp.concatenate(
                [bidx_col, jnp.transpose(idx_all[s])], axis=1),   # (N, 4) int32
            "xyz_res": jnp.transpose(res_all[s]),                  # (N, 3) float32
        }
    return pc, info


# ----------------------------------------------------------------------------
# Pure numpy reference (same folded constants / op order as the kernel).
# ----------------------------------------------------------------------------
def _reference(pc_np, indicator):
    counts = np.diff(np.asarray(indicator, dtype=np.int64))
    indicator_t = np.repeat(np.arange(len(indicator) - 1, dtype=np.int32), counts)
    out = {}
    for scale in SCALES:
        idxs, ress = [], []
        for d in range(3):
            mul, add = _fold_constants(scale, d)
            idx = pc_np[:, d].astype(np.float32) * np.float32(mul) + np.float32(add)
            idx_i = idx.astype(np.int32)
            idxs.append(idx_i)
            ress.append(idx - idx_i.astype(np.float32))
        out[scale] = {
            "bxyz_indx": np.stack([indicator_t] + idxs, axis=-1),
            "xyz_res": np.stack(ress, axis=-1).astype(np.float32),
        }
    return out


if __name__ == "__main__":
    key = jax.random.PRNGKey(0)
    N, batch = 300, 2            # small demo; NOT a multiple of 128 (exercises padding)
    kx, ky, kz, ki = jax.random.split(key, 4)

    # Deterministic voxel-center coordinates on the finest grid: keeps idx away
    # from integer boundaries so the trunc comparison vs. numpy is robust to
    # sub-ulp arithmetic differences.
    fine = 1.0 / min(SCALES)
    coords = []
    for d, kk in zip(range(3), (kx, ky, kz)):
        size_fine = int(math.floor(GRID_SIZES[d] * fine))
        cell = jax.random.randint(kk, (N, 1), 0, size_fine)
        rng = LIMS[d][1] - LIMS[d][0]
        coords.append(
            LIMS[d][0] + (cell.astype(jnp.float32) + 0.5) / size_fine * rng)
    inten = jax.random.uniform(ki, (N, 1), dtype=jnp.float32)
    pc = jnp.concatenate(coords + [inten], axis=-1).astype(jnp.float32)

    indicator = [0, 128, 300]    # 2 batches with uneven sizes

    pc_out, info = pc_preprocessor_3d_slim(pc, indicator)
    for scale in SCALES:
        jax.block_until_ready(info[scale]["bxyz_indx"])
        jax.block_until_ready(info[scale]["xyz_res"])

    # correctness check against numpy reference
    ref = _reference(np.asarray(pc, dtype=np.float32), indicator)
    for scale in SCALES:
        np.testing.assert_array_equal(
            np.asarray(info[scale]["bxyz_indx"]), ref[scale]["bxyz_indx"])
        np.testing.assert_allclose(
            np.asarray(info[scale]["xyz_res"]), ref[scale]["xyz_res"],
            rtol=1e-5, atol=2e-5)

    print("KERNEL_OK")
</pallas_src>

<mosaic_0001>
module attributes {stable_mosaic.version = 11 : i64} {
  func.func @quant_kernel(%arg0: i32, %arg1: memref<3x3x128xf32, #tpu.memory_space<vmem>>, %arg2: memref<2x3x3x128xi32, #tpu.memory_space<vmem>>, %arg3: memref<2x3x3x128xf32, #tpu.memory_space<vmem>>) attributes {dimension_semantics = [#tpu.dimension_semantics<parallel>], iteration_bounds = array<i64: 1>, scalar_prefetch = 0 : i64, scratch_operands = 0 : i64, tpu.core_type = #tpu.core_type<tc>, window_params = [{transform_indices = @transform_0, window_bounds = array<i64: 3, 3, 128>}, {transform_indices = @transform_1, window_bounds = array<i64: 2, 3, 3, 128>}, {transform_indices = @transform_2, window_bounds = array<i64: 2, 3, 3, 128>}]} {
    %c0 = arith.constant 0 : index
    %c0_0 = arith.constant 0 : index
    %c0_1 = arith.constant 0 : index
    %0 = vector.load %arg1[%c0, %c0_0, %c0_1] : memref<3x3x128xf32, #tpu.memory_space<vmem>>, vector<1x3x128xf32>
    %1 = vector.shape_cast %0 : vector<1x3x128xf32> to vector<3x128xf32>
    %cst = arith.constant 4.000000e+00 : f32
    %2 = vector.broadcast %cst : f32 to vector<3x128xf32>
    %3 = arith.mulf %1, %2 : vector<3x128xf32>
    %cst_2 = arith.constant 2.000000e+02 : f32
    %4 = vector.broadcast %cst_2 : f32 to vector<3x128xf32>
    %5 = arith.addf %3, %4 : vector<3x128xf32>
    %6 = arith.fptosi %5 : vector<3x128xf32> to vector<3x128xi32>
    %c0_3 = arith.constant 0 : index
    %c0_4 = arith.constant 0 : index
    %c0_5 = arith.constant 0 : index
    %c0_6 = arith.constant 0 : index
    %7 = vector.load %arg2[%c0_3, %c0_4, %c0_5, %c0_6] : memref<2x3x3x128xi32, #tpu.memory_space<vmem>>, vector<1x1x3x128xi32>
    %8 = vector.shape_cast %7 : vector<1x1x3x128xi32> to vector<3x128xi32>
    %9 = vector.shape_cast %6 : vector<3x128xi32> to vector<1x1x3x128xi32>
    tpu.vector_store %arg2[%c0_3, %c0_4, %c0_5, %c0_6], %9 {strides = array<i32>} : memref<2x3x3x128xi32, #tpu.memory_space<vmem>>, vector<1x1x3x128xi32>,
    %10 = arith.sitofp %6 : vector<3x128xi32> to vector<3x128xf32>
    %11 = arith.subf %5, %10 : vector<3x128xf32>
    %c0_7 = arith.constant 0 : index
    %c0_8 = arith.constant 0 : index
    %c0_9 = arith.constant 0 : index
    %c0_10 = arith.constant 0 : index
    %12 = vector.load %arg3[%c0_7, %c0_8, %c0_9, %c0_10] : memref<2x3x3x128xf32, #tpu.memory_space<vmem>>, vector<1x1x3x128xf32>
    %13 = vector.shape_cast %12 : vector<1x1x3x128xf32> to vector<3x128xf32>
    %14 = vector.shape_cast %11 : vector<3x128xf32> to vector<1x1x3x128xf32>
    tpu.vector_store %arg3[%c0_7, %c0_8, %c0_9, %c0_10], %14 {strides = array<i32>} : memref<2x3x3x128xf32, #tpu.memory_space<vmem>>, vector<1x1x3x128xf32>,
    %cst_11 = arith.constant 2.000000e+00 : f32
    %15 = vector.broadcast %cst_11 : f32 to vector<3x128xf32>
    %16 = arith.mulf %1, %15 : vector<3x128xf32>
    %cst_12 = arith.constant 1.000000e+02 : f32
    %17 = vector.broadcast %cst_12 : f32 to vector<3x128xf32>
    %18 = arith.addf %16, %17 : vector<3x128xf32>
    %19 = arith.fptosi %18 : vector<3x128xf32> to vector<3x128xi32>
    %c1 = arith.constant 1 : index
    %c0_13 = arith.constant 0 : index
    %c0_14 = arith.constant 0 : index
    %c0_15 = arith.constant 0 : index
    %20 = vector.load %arg2[%c1, %c0_13, %c0_14, %c0_15] : memref<2x3x3x128xi32, #tpu.memory_space<vmem>>, vector<1x1x3x128xi32>
    %21 = vector.shape_cast %20 : vector<1x1x3x128xi32> to vector<3x128xi32>
    %22 = vector.shape_cast %19 : vector<3x128xi32> to vector<1x1x3x128xi32>
    tpu.vector_store %arg2[%c1, %c0_13, %c0_14, %c0_15], %22 {strides = array<i32>} : memref<2x3x3x128xi32, #tpu.memory_space<vmem>>, vector<1x1x3x128xi32>,
    %23 = arith.sitofp %19 : vector<3x128xi32> to vector<3x128xf32>
    %24 = arith.subf %18, %23 : vector<3x128xf32>
    %c1_16 = arith.constant 1 : index
    %c0_17 = arith.constant 0 : index
    %c0_18 = arith.constant 0 : index
    %c0_19 = arith.constant 0 : index
    %25 = vector.load %arg3[%c1_16, %c0_17, %c0_18, %c0_19] : memref<2x3x3x128xf32, #tpu.memory_space<vmem>>, vector<1x1x3x128xf32>
    %26 = vector.shape_cast %25 : vector<1x1x3x128xf32> to vector<3x128xf32>
    %27 = vector.shape_cast %24 : vector<3x128xf32> to vector<1x1x3x128xf32>
    tpu.vector_store %arg3[%c1_16, %c0_17, %c0_18, %c0_19], %27 {strides = array<i32>} : memref<2x3x3x128xf32, #tpu.memory_space<vmem>>, vector<1x1x3x128xf32>,
    %c1_20 = arith.constant 1 : index
    %c0_21 = arith.constant 0 : index
    %c0_22 = arith.constant 0 : index
    %28 = vector.load %arg1[%c1_20, %c0_21, %c0_22] : memref<3x3x128xf32, #tpu.memory_space<vmem>>, vector<1x3x128xf32>
    %29 = vector.shape_cast %28 : vector<1x3x128xf32> to vector<3x128xf32>
    %cst_23 = arith.constant 4.000000e+00 : f32
    %30 = vector.broadcast %cst_23 : f32 to vector<3x128xf32>
    %31 = arith.mulf %29, %30 : vector<3x128xf32>
    %cst_24 = arith.constant 2.000000e+02 : f32
    %32 = vector.broadcast %cst_24 : f32 to vector<3x128xf32>
    %33 = arith.addf %31, %32 : vector<3x128xf32>
    %34 = arith.fptosi %33 : vector<3x128xf32> to vector<3x128xi32>
    %c0_25 = arith.constant 0 : index
    %c1_26 = arith.constant 1 : index
    %c0_27 = arith.constant 0 : index
    %c0_28 = arith.constant 0 : index
    %35 = vector.load %arg2[%c0_25, %c1_26, %c0_27, %c0_28] : memref<2x3x3x128xi32, #tpu.memory_space<vmem>>, vector<1x1x3x128xi32>
    %36 = vector.shape_cast %35 : vector<1x1x3x128xi32> to vector<3x128xi32>
    %37 = vector.shape_cast %34 : vector<3x128xi32> to vector<1x1x3x128xi32>
    tpu.vector_store %arg2[%c0_25, %c1_26, %c0_27, %c0_28], %37 {strides = array<i32>} : memref<2x3x3x128xi32, #tpu.memory_space<vmem>>, vector<1x1x3x128xi32>,
    %38 = arith.sitofp %34 : vector<3x128xi32> to vector<3x128xf32>
    %39 = arith.subf %33, %38 : vector<3x128xf32>
    %c0_29 = arith.constant 0 : index
    %c1_30 = arith.constant 1 : index
    %c0_31 = arith.constant 0 : index
    %c0_32 = arith.constant 0 : index
    %40 = vector.load %arg3[%c0_29, %c1_30, %c0_31, %c0_32] : memref<2x3x3x128xf32, #tpu.memory_space<vmem>>, vector<1x1x3x128xf32>
    %41 = vector.shape_cast %40 : vector<1x1x3x128xf32> to vector<3x128xf32>
    %42 = vector.shape_cast %39 : vector<3x128xf32> to vector<1x1x3x128xf32>
    tpu.vector_store %arg3[%c0_29, %c1_30, %c0_31, %c0_32], %42 {strides = array<i32>} : memref<2x3x3x128xf32, #tpu.memory_space<vmem>>, vector<1x1x3x128xf32>,
    %cst_33 = arith.constant 2.000000e+00 : f32
    %43 = vector.broadcast %cst_33 : f32 to vector<3x128xf32>
    %44 = arith.mulf %29, %43 : vector<3x128xf32>
    %cst_34 = arith.constant 1.000000e+02 : f32
    %45 = vector.broadcast %cst_34 : f32 to vector<3x128xf32>
    %46 = arith.addf %44, %45 : vector<3x128xf32>
    %47 = arith.fptosi %46 : vector<3x128xf32> to vector<3x128xi32>
    %c1_35 = arith.constant 1 : index
    %c1_36 = arith.constant 1 : index
    %c0_37 = arith.constant 0 : index
    %c0_38 = arith.constant 0 : index
    %48 = vector.load %arg2[%c1_35, %c1_36, %c0_37, %c0_38] : memref<2x3x3x128xi32, #tpu.memory_space<vmem>>, vector<1x1x3x128xi32>
    %49 = vector.shape_cast %48 : vector<1x1x3x128xi32> to vector<3x128xi32>
    %50 = vector.shape_cast %47 : vector<3x128xi32> to vector<1x1x3x128xi32>
    tpu.vector_store %arg2[%c1_35, %c1_36, %c0_37, %c0_38], %50 {strides = array<i32>} : memref<2x3x3x128xi32, #tpu.memory_space<vmem>>, vector<1x1x3x128xi32>,
    %51 = arith.sitofp %47 : vector<3x128xi32> to vector<3x128xf32>
    %52 = arith.subf %46, %51 : vector<3x128xf32>
    %c1_39 = arith.constant 1 : index
    %c1_40 = arith.constant 1 : index
    %c0_41 = arith.constant 0 : index
    %c0_42 = arith.constant 0 : index
    %53 = vector.load %arg3[%c1_39, %c1_40, %c0_41, %c0_42] : memref<2x3x3x128xf32, #tpu.memory_space<vmem>>, vector<1x1x3x128xf32>
    %54 = vector.shape_cast %53 : vector<1x1x3x128xf32> to vector<3x128xf32>
    %55 = vector.shape_cast %52 : vector<3x128xf32> to vector<1x1x3x128xf32>
    tpu.vector_store %arg3[%c1_39, %c1_40, %c0_41, %c0_42], %55 {strides = array<i32>} : memref<2x3x3x128xf32, #tpu.memory_space<vmem>>, vector<1x1x3x128xf32>,
    %c2 = arith.constant 2 : index
    %c0_43 = arith.constant 0 : index
    %c0_44 = arith.constant 0 : index
    %56 = vector.load %arg1[%c2, %c0_43, %c0_44] : memref<3x3x128xf32, #tpu.memory_space<vmem>>, vector<1x3x128xf32>
    %57 = vector.shape_cast %56 : vector<1x3x128xf32> to vector<3x128xf32>
    %cst_45 = arith.constant 1.000000e+01 : f32
    %58 = vector.broadcast %cst_45 : f32 to vector<3x128xf32>
    %59 = arith.mulf %57, %58 : vector<3x128xf32>
    %cst_46 = arith.constant 4.000000e+01 : f32
    %60 = vector.broadcast %cst_46 : f32 to vector<3x128xf32>
    %61 = arith.addf %59, %60 : vector<3x128xf32>
    %62 = arith.fptosi %61 : vector<3x128xf32> to vector<3x128xi32>
    %c0_47 = arith.constant 0 : index
    %c2_48 = arith.constant 2 : index
    %c0_49 = arith.constant 0 : index
    %c0_50 = arith.constant 0 : index
    %63 = vector.load %arg2[%c0_47, %c2_48, %c0_49, %c0_50] : memref<2x3x3x128xi32, #tpu.memory_space<vmem>>, vector<1x1x3x128xi32>
    %64 = vector.shape_cast %63 : vector<1x1x3x128xi32> to vector<3x128xi32>
    %65 = vector.shape_cast %62 : vector<3x128xi32> to vector<1x1x3x128xi32>
    tpu.vector_store %arg2[%c0_47, %c2_48, %c0_49, %c0_50], %65 {strides = array<i32>} : memref<2x3x3x128xi32, #tpu.memory_space<vmem>>, vector<1x1x3x128xi32>,
    %66 = arith.sitofp %62 : vector<3x128xi32> to vector<3x128xf32>
    %67 = arith.subf %61, %66 : vector<3x128xf32>
    %c0_51 = arith.constant 0 : index
    %c2_52 = arith.constant 2 : index
    %c0_53 = arith.constant 0 : index
    %c0_54 = arith.constant 0 : index
    %68 = vector.load %arg3[%c0_51, %c2_52, %c0_53, %c0_54] : memref<2x3x3x128xf32, #tpu.memory_space<vmem>>, vector<1x1x3x128xf32>
    %69 = vector.shape_cast %68 : vector<1x1x3x128xf32> to vector<3x128xf32>
    %70 = vector.shape_cast %67 : vector<3x128xf32> to vector<1x1x3x128xf32>
    tpu.vector_store %arg3[%c0_51, %c2_52, %c0_53, %c0_54], %70 {strides = array<i32>} : memref<2x3x3x128xf32, #tpu.memory_space<vmem>>, vector<1x1x3x128xf32>,
    %cst_55 = arith.constant 5.000000e+00 : f32
    %71 = vector.broadcast %cst_55 : f32 to vector<3x128xf32>
    %72 = arith.mulf %57, %71 : vector<3x128xf32>
    %cst_56 = arith.constant 2.000000e+01 : f32
    %73 = vector.broadcast %cst_56 : f32 to vector<3x128xf32>
    %74 = arith.addf %72, %73 : vector<3x128xf32>
    %75 = arith.fptosi %74 : vector<3x128xf32> to vector<3x128xi32>
    %c1_57 = arith.constant 1 : index
    %c2_58 = arith.constant 2 : index
    %c0_59 = arith.constant 0 : index
    %c0_60 = arith.constant 0 : index
    %76 = vector.load %arg2[%c1_57, %c2_58, %c0_59, %c0_60] : memref<2x3x3x128xi32, #tpu.memory_space<vmem>>, vector<1x1x3x128xi32>
    %77 = vector.shape_cast %76 : vector<1x1x3x128xi32> to vector<3x128xi32>
    %78 = vector.shape_cast %75 : vector<3x128xi32> to vector<1x1x3x128xi32>
    tpu.vector_store %arg2[%c1_57, %c2_58, %c0_59, %c0_60], %78 {strides = array<i32>} : memref<2x3x3x128xi32, #tpu.memory_space<vmem>>, vector<1x1x3x128xi32>,
    %79 = arith.sitofp %75 : vector<3x128xi32> to vector<3x128xf32>
    %80 = arith.subf %74, %79 : vector<3x128xf32>
    %c1_61 = arith.constant 1 : index
    %c2_62 = arith.constant 2 : index
    %c0_63 = arith.constant 0 : index
    %c0_64 = arith.constant 0 : index
    %81 = vector.load %arg3[%c1_61, %c2_62, %c0_63, %c0_64] : memref<2x3x3x128xf32, #tpu.memory_space<vmem>>, vector<1x1x3x128xf32>
    %82 = vector.shape_cast %81 : vector<1x1x3x128xf32> to vector<3x128xf32>
    %83 = vector.shape_cast %80 : vector<3x128xf32> to vector<1x1x3x128xf32>
    tpu.vector_store %arg3[%c1_61, %c2_62, %c0_63, %c0_64], %83 {strides = array<i32>} : memref<2x3x3x128xf32, #tpu.memory_space<vmem>>, vector<1x1x3x128xf32>,
    return
  }
  func.func @transform_0(%arg0: i32) -> (i32, i32, i32) {
    %c0_i32 = arith.constant 0 : i32
    %c0_i32_0 = arith.constant 0 : i32
    %c0_i32_1 = arith.constant 0 : i32
    return %c0_i32, %arg0, %c0_i32_0 : i32, i32, i32
  }
  func.func @transform_1(%arg0: i32) -> (i32, i32, i32, i32) {
    %c0_i32 = arith.constant 0 : i32
    %c0_i32_0 = arith.constant 0 : i32
    %c0_i32_1 = arith.constant 0 : i32
    %c0_i32_2 = arith.constant 0 : i32
    return %c0_i32, %c0_i32_0, %arg0, %c0_i32_1 : i32, i32, i32, i32
  }
  func.func @transform_2(%arg0: i32) -> (i32, i32, i32, i32) {
    %c0_i32 = arith.constant 0 : i32
    %c0_i32_0 = arith.constant 0 : i32
    %c0_i32_1 = arith.constant 0 : i32
    %c0_i32_2 = arith.constant 0 : i32
    return %c0_i32, %c0_i32_0, %arg0, %c0_i32_1 : i32, i32, i32, i32
  }
}

</mosaic_0001>

<llo_original>
// kernel: tpu_custom_call.1
$region0: #{tpu_custom_call.1}
  #allocation0 [shape = 'u32[]', space=smem, size = 0x4, offset = 0x4, fixed_abs, tag = 'smem constant byte address 0x4 - core index']
  #allocation1 [shape = 'u32[144,128]{1,0:T(1,128)}', space=vmem, size = 0x12000, scoped, tag = 'internal scratch']
  %s0 = inlined_call_operand.hbm [shape: f32[3,3,128], index: 0, kind: input, shape index: {}]
  %s1 = inlined_call_operand.vmem [shape: s32[2,3,3,128], index: 1, kind: output, shape index: {0}]
  %s2 = inlined_call_operand.vmem [shape: f32[2,3,3,128], index: 2, kind: output, shape index: {1}]
  %3 = xla_tuple %s1, %s2
  %s4 = sld [smem:[#allocation0]]
  $region26: #{tpu_custom_call.1} parent=0
    _
  %s6 = ssub.s32 1, %s4
  %s7 = scalar_select 0, %s6, %s4
  $region1: #{tpu_custom_call.1} parent=0
    #allocation2 [shape = 'u8[6144]{0}', space=vmem, size = 0x1800, scoped, tag = 'input window, operand 0, single buffered']
    #allocation3 [shape = 's32[1]{0}', space=sflag, size = 0x4, scoped, tag = 'scoped memory for tpu_custom_call.1']
    %8 = vsyncpa [#allocation3], 0
    // Predicated region
    $region2: #{tpu_custom_call.1} parent=1 // pred_check
      _
    $region3: #{tpu_custom_call.1} parent=1 // pred_check_branch
      %10 = sbr.rel (0) target = $region5
    $region4: #{tpu_custom_call.1} parent=1 // pred_region
      %s12 = ssub.s32 192, 192
      %13 = vsyncadd [#allocation3], %s12
      %s14 = sshll.u32 [#allocation2], 4
      %s15 = int_to_ptr.vmem [resolvable:$true] %s14
      %20 = dma.hbm_to_vmem [thread:$0]  %s0, 192, %s15, [#allocation3], 64, 64, 4
    $region5: #{tpu_custom_call.1} parent=1 // pred_fallthru
      _
    // Predicated region
    $region6: #{tpu_custom_call.1} parent=1 // pred_check
      _
    $region7: #{tpu_custom_call.1} parent=1 // pred_check_branch
      %22 = sbr.rel (0) target = $region9
    $region8: #{tpu_custom_call.1} parent=1 // pred_region
      %23 = dma.done [#allocation3], 192
    $region9: #{tpu_custom_call.1} parent=1 // pred_fallthru
      _
    %v24 = vld [vmem:[#allocation2] sm:$0x7]
    %v25 = vmul.f32 %v24, 4.0
    %v26 = vadd.f32 %v25, 200.0
    %v27 = vcvt.f32.s32.to.zero.pseudo %v26
    %28 = vst [vmem:[%s1] sm:$0x7] %v27
    %v29 = vcvt.s32.f32 %v27
    %v30 = vsub.f32 %v26, %v29
    %31 = vst [vmem:[%s2] sm:$0x7] %v30
    %v32 = vmul.f32 %v24, 2.0
    %v33 = vadd.f32 %v32, 100.0
    %v34 = vcvt.f32.s32.to.zero.pseudo %v33
    %s35 = scalar_lea.vmem %s1, 12
    %36 = vst [vmem:[%s35] sm:$0x7] %v34
    %v37 = vcvt.s32.f32 %v34
    %v38 = vsub.f32 %v33, %v37
    %s39 = scalar_lea.vmem %s2, 12
    %40 = vst [vmem:[%s39] sm:$0x7] %v38
    %s41 = scalar_lea.vmem [#allocation2], 4
    %v42 = vld [vmem:[%s41] sm:$0x7]
    %v43 = vmul.f32 %v42, 4.0
    %v44 = vadd.f32 %v43, 200.0
    %v45 = vcvt.f32.s32.to.zero.pseudo %v44
    %s46 = scalar_lea.vmem %s1, 4
    %47 = vst [vmem:[%s46] sm:$0x7] %v45
    %v48 = vcvt.s32.f32 %v45
    %v49 = vsub.f32 %v44, %v48
    %s50 = scalar_lea.vmem %s2, 4
    %51 = vst [vmem:[%s50] sm:$0x7] %v49
    %v52 = vmul.f32 %v42, 2.0
    %v53 = vadd.f32 %v52, 100.0
    %v54 = vcvt.f32.s32.to.zero.pseudo %v53
    %s55 = scalar_lea.vmem %s1, 16
    %56 = vst [vmem:[%s55] sm:$0x7] %v54
    %v57 = vcvt.s32.f32 %v54
    %v58 = vsub.f32 %v53, %v57
    %s59 = scalar_lea.vmem %s2, 16
    %60 = vst [vmem:[%s59] sm:$0x7] %v58
    %s61 = scalar_lea.vmem [#allocation2], 8
    %v62 = vld [vmem:[%s61] sm:$0x7]
    %v63 = vmul.f32 %v62, 10.0
    %v64 = vadd.f32 %v63, 40.0
    %v65 = vcvt.f32.s32.to.zero.pseudo %v64
    %s66 = scalar_lea.vmem %s1, 8
    %67 = vst [vmem:[%s66] sm:$0x7] %v65
    %v68 = vcvt.s32.f32 %v65
    %v69 = vsub.f32 %v64, %v68
    %s70 = scalar_lea.vmem %s2, 8
    %71 = vst [vmem:[%s70] sm:$0x7] %v69
    %v72 = vmul.f32 %v62, 5.0
    %v73 = vadd.f32 %v72, 20.0
    %v74 = vcvt.f32.s32.to.zero.pseudo %v73
    %s75 = scalar_lea.vmem %s1, 20
    %76 = vst [vmem:[%s75] sm:$0x7] %v74
    %v77 = vcvt.s32.f32 %v74
    %v78 = vsub.f32 %v73, %v77
    %s79 = scalar_lea.vmem %s2, 20
    %80 = vst [vmem:[%s79] sm:$0x7] %v78
    // Predicated region
    $region10: #{tpu_custom_call.1} parent=1 // pred_check
      _
    $region11: #{tpu_custom_call.1} parent=1 // pred_check_branch
      %82 = sbr.rel (0) target = $region13
    $region12: #{tpu_custom_call.1} parent=1 // pred_region
      _
    $region13: #{tpu_custom_call.1} parent=1 // pred_fallthru
      _
    // Predicated region
    $region14: #{tpu_custom_call.1} parent=1 // pred_check
      _
    $region15: #{tpu_custom_call.1} parent=1 // pred_check_branch
      %84 = sbr.rel (0) target = $region17
    $region16: #{tpu_custom_call.1} parent=1 // pred_region
      _
    $region17: #{tpu_custom_call.1} parent=1 // pred_fallthru
      _
    // Predicated region
    $region18: #{tpu_custom_call.1} parent=1 // pred_check
      _
    $region19: #{tpu_custom_call.1} parent=1 // pred_check_branch
      %86 = sbr.rel (0) target = $region21
    $region20: #{tpu_custom_call.1} parent=1 // pred_region
      _
    $region21: #{tpu_custom_call.1} parent=1 // pred_fallthru
      _
    // Predicated region
    $region22: #{tpu_custom_call.1} parent=1 // pred_check
      _
    $region23: #{tpu_custom_call.1} parent=1 // pred_check_branch
      %88 = sbr.rel (0) target = $region25
    $region24: #{tpu_custom_call.1} parent=1 // pred_region
      _
    $region25: #{tpu_custom_call.1} parent=1 // pred_fallthru
      _
    %89 = vsyncpa [#allocation3], 1

</llo_original>
